<compile_context>
chip_gen: v7x
topology: tpu7x:2x2x1
jax: 0.10.0
libtpu: 0.0.40
codegen_flags: <defaults>
</compile_context>

<pallas_src>
import jax
import jax.numpy as jnp
from jax.experimental import pallas as pl
from jax.experimental.pallas import tpu as pltpu


def _round_up(x, m):
    return ((x + m - 1) // m) * m


def _uncond_disc_kernel(x_ref, w_ref, b_ref, o_ref):
    # x_ref: [tm, K], w_ref: [K, OC_pad], b_ref: [1, OC_pad], o_ref: [tm, OC_pad]
    acc = jnp.dot(x_ref[...], w_ref[...], preferred_element_type=jnp.float32)
    o_ref[...] = (acc + b_ref[...].astype(jnp.float32)).astype(o_ref.dtype)


def uncond_discriminator_forward(x_nchw, weight, bias, *, block_rows=2048):
    """x_nchw: [N, C, 4, 4]; weight: [OC, C, 4, 4]; bias: [OC] -> [N, OC, 1, 1]."""
    N, C, H, W = x_nchw.shape
    OC = weight.shape[0]
    assert H == 4 and W == 4, "UncondDiscriminator expects 4x4 spatial input"
    assert weight.shape == (OC, C, 4, 4)
    K = C * H * W

    x_itemsize = jnp.dtype(x_nchw.dtype).itemsize
    w_itemsize = jnp.dtype(weight.dtype).itemsize

    # Lane-dense output: pad OC to a multiple of 128 (unmasked vst, full MXU width).
    OC_pad = _round_up(OC, 128)

    # --- Tile-size selection -------------------------------------------------
    # VMEM budget: double-buffered X tile + double-buffered output tile per row,
    # plus (conservatively double-buffered) weight and bias.  Sized against
    # ~24 MiB with vmem_limit_bytes=32 MiB requested below (all generations have
    # >= 64 MiB physical VMEM, so this is safe everywhere).
    vmem_budget = 24 << 20
    fixed_bytes = 2 * K * OC_pad * w_itemsize + 2 * OC_pad * 4
    per_row_bytes = 2 * K * x_itemsize + 2 * OC_pad * x_itemsize
    if vmem_budget > fixed_bytes:
        cap_rows = max(8, ((vmem_budget - fixed_bytes) // per_row_bytes) // 8 * 8)
    else:
        cap_rows = 8

    tm = min(block_rows, cap_rows)
    # Keep >= 2 grid steps when N allows it so both v7x TensorCores get work.
    tm = min(tm, _round_up(pl.cdiv(N, 2), 8))
    tm = max(8, (tm // 8) * 8)

    grid = (pl.cdiv(N, tm),)  # last block may be partial; Pallas clips it.

    # --- Host-side operand prep ----------------------------------------------
    # Row-major flatten of (ic, kh, kw): trailing-dim collapse -> free reshape.
    x_flat = x_nchw.reshape(N, K)

    # Weight as [K, OC_pad]: MXU-native contraction layout. Weight is tiny
    # (K*OC elements), so this transpose/pad is negligible HBM traffic.
    w_kn = weight.reshape(OC, K).T                      # [K, OC]
    if OC_pad != OC:
        w_kn = jnp.pad(w_kn, ((0, 0), (0, OC_pad - OC)))
    b_row = jnp.pad(bias, (0, OC_pad - OC)).reshape(1, OC_pad)

    # Honest scheduler hint: true N, true bytes.
    cost = pl.CostEstimate(
        flops=2 * N * K * OC_pad,
        transcendentals=0,
        bytes_accessed=(N * K * x_itemsize
                        + K * OC_pad * w_itemsize
                        + OC_pad * 4
                        + N * OC_pad * x_itemsize),
    )

    out = pl.pallas_call(
        _uncond_disc_kernel,
        out_shape=jax.ShapeDtypeStruct((N, OC_pad), x_nchw.dtype),
        grid_spec=pltpu.PrefetchScalarGridSpec(
            num_scalar_prefetch=0,
            grid=grid,
            in_specs=[
                pl.BlockSpec((tm, K), lambda i: (i, 0)),       # X tile, pipelined
                pl.BlockSpec((K, OC_pad), lambda i: (0, 0)),   # weight, constant index
                pl.BlockSpec((1, OC_pad), lambda i: (0, 0)),   # bias, constant index
            ],
            out_specs=pl.BlockSpec((tm, OC_pad), lambda i: (i, 0)),
        ),
        compiler_params=pltpu.CompilerParams(
            dimension_semantics=("parallel",),
            vmem_limit_bytes=32 * 1024 * 1024,
        ),
        cost_estimate=cost,
    )(x_flat, w_kn, b_row)

    return out[:, :OC].reshape(N, OC, 1, 1)


def _reference_forward(x_nchw, weight, bias):
    out = jax.lax.conv_general_dilated(
        x_nchw, weight, window_strides=(4, 4), padding="VALID",
        dimension_numbers=("NCHW", "OIHW", "NCHW"),
    )
    return out + bias.reshape(1, -1, 1, 1)


if __name__ == "__main__":
    key = jax.random.PRNGKey(0)
    k_x, k_w, k_b, k_x2 = jax.random.split(key, 4)

    in_chans = 4             # module's in_chans
    out_chans = 8
    N = 2
    C = in_chans * 8         # conv input channels = 8 * in_chans = 32

    x = jax.random.normal(k_x, (N, C, 4, 4), dtype=jnp.float32)
    weight = jax.random.normal(k_w, (out_chans, C, 4, 4), dtype=jnp.float32) * 0.05
    bias = jax.random.normal(k_b, (out_chans,), dtype=jnp.float32) * 0.05

    out = jax.block_until_ready(uncond_discriminator_forward(x, weight, bias))
    ref = _reference_forward(x, weight, bias)
    assert out.shape == (N, out_chans, 1, 1), out.shape
    assert jnp.allclose(out, ref, atol=1e-4, rtol=1e-4), "mismatch vs reference (N=2)"

    # Multi-block grid with a partial last block (default tm cap -> 2 steps).
    N2 = 60
    x2 = jax.random.normal(k_x2, (N2, C, 4, 4), dtype=jnp.float32)
    out2 = jax.block_until_ready(uncond_discriminator_forward(x2, weight, bias))
    ref2 = _reference_forward(x2, weight, bias)
    assert out2.shape == (N2, out_chans, 1, 1), out2.shape
    assert jnp.allclose(out2, ref2, atol=1e-4, rtol=1e-4), "mismatch vs reference (N=60)"

    # Force a longer grid (4 steps, partial last block) via a small block_rows.
    out3 = jax.block_until_ready(
        uncond_discriminator_forward(x2, weight, bias, block_rows=16))
    assert jnp.allclose(out3, ref2, atol=1e-4, rtol=1e-4), "mismatch vs reference (tm=16)"

    print("KERNEL_OK")
</pallas_src>

<mosaic_0001>
module attributes {stable_mosaic.version = 11 : i64} {
  func.func @_uncond_disc_kernel(%arg0: i32, %arg1: memref<8x512xf32, #tpu.memory_space<vmem>>, %arg2: memref<512x128xf32, #tpu.memory_space<vmem>>, %arg3: memref<1x128xf32, #tpu.memory_space<vmem>>, %arg4: memref<8x128xf32, #tpu.memory_space<vmem>>) attributes {dimension_semantics = [#tpu.dimension_semantics<parallel>], iteration_bounds = array<i64: 1>, scalar_prefetch = 0 : i64, scratch_operands = 0 : i64, tpu.core_type = #tpu.core_type<tc>, window_params = [{transform_indices = @transform_0, window_bounds = array<i64: 8, 512>}, {pipeline_mode = #tpu.pipeline_mode<synchronous>, transform_indices = @transform_1, window_bounds = array<i64: 512, 128>}, {pipeline_mode = #tpu.pipeline_mode<synchronous>, transform_indices = @transform_2, window_bounds = array<i64: 1, 128>}, {transform_indices = @transform_3, window_bounds = array<i64: 8, 128>}]} {
    %c0 = arith.constant 0 : index
    %c0_0 = arith.constant 0 : index
    %0 = vector.load %arg1[%c0, %c0_0] : memref<8x512xf32, #tpu.memory_space<vmem>>, vector<8x512xf32>
    %c0_1 = arith.constant 0 : index
    %c0_2 = arith.constant 0 : index
    %1 = vector.load %arg2[%c0_1, %c0_2] : memref<512x128xf32, #tpu.memory_space<vmem>>, vector<512x128xf32>
    %cst = arith.constant dense<0.000000e+00> : vector<8x128xf32>
    %2 = tpu.matmul %0, %1, %cst {dimension_numbers = #tpu.dot_dimension_numbers<[1], [0], [0], [1], [0, 0, 1, 1], [], []>} : vector<8x512xf32>, vector<512x128xf32>, vector<8x128xf32> -> vector<8x128xf32>
    %c0_3 = arith.constant 0 : index
    %c0_4 = arith.constant 0 : index
    %3 = vector.load %arg3[%c0_3, %c0_4] : memref<1x128xf32, #tpu.memory_space<vmem>>, vector<1x128xf32>
    %4 = vector.broadcast %3 : vector<1x128xf32> to vector<8x128xf32>
    %5 = arith.addf %2, %4 : vector<8x128xf32>
    %c0_5 = arith.constant 0 : index
    %c0_6 = arith.constant 0 : index
    %6 = vector.load %arg4[%c0_5, %c0_6] : memref<8x128xf32, #tpu.memory_space<vmem>>, vector<8x128xf32>
    tpu.vector_store %arg4[%c0_5, %c0_6], %5 {strides = array<i32>} : memref<8x128xf32, #tpu.memory_space<vmem>>, vector<8x128xf32>,
    return
  }
  func.func @transform_0(%arg0: i32) -> (i32, i32) {
    %c0_i32 = arith.constant 0 : i32
    %c0_i32_0 = arith.constant 0 : i32
    return %arg0, %c0_i32 : i32, i32
  }
  func.func @transform_1(%arg0: i32) -> (i32, i32) {
    %c0_i32 = arith.constant 0 : i32
    %c0_i32_0 = arith.constant 0 : i32
    %c0_i32_1 = arith.constant 0 : i32
    return %c0_i32, %c0_i32_0 : i32, i32
  }
  func.func @transform_2(%arg0: i32) -> (i32, i32) {
    %c0_i32 = arith.constant 0 : i32
    %c0_i32_0 = arith.constant 0 : i32
    %c0_i32_1 = arith.constant 0 : i32
    return %c0_i32, %c0_i32_0 : i32, i32
  }
  func.func @transform_3(%arg0: i32) -> (i32, i32) {
    %c0_i32 = arith.constant 0 : i32
    %c0_i32_0 = arith.constant 0 : i32
    return %arg0, %c0_i32 : i32, i32
  }
}

</mosaic_0001>

<llo_original>
// kernel: tpu_custom_call.1
$region0: #{tpu_custom_call.1}
  #allocation0 [shape = 'u32[]', space=smem, size = 0x4, offset = 0x4, fixed_abs, tag = 'smem constant byte address 0x4 - core index']
  #allocation1 [shape = 'u32[144,128]{1,0:T(1,128)}', space=vmem, size = 0x12000, scoped, tag = 'internal scratch']
  %s0 = inlined_call_operand.hbm [shape: f32[2,512], index: 0, kind: input, shape index: {}]
  %s1 = inlined_call_operand.hbm [shape: f32[512,128], index: 1, kind: input, shape index: {}]
  %s2 = inlined_call_operand.vmem [shape: f32[1,128], index: 2, kind: input, shape index: {}]
  %s3 = inlined_call_operand.hbm [shape: f32[2,128], index: 3, kind: output, shape index: {}]
  %s4 = sld [smem:[#allocation0]]
  $region30: #{tpu_custom_call.1} parent=0
    _
  %s6 = ssub.s32 1, %s4
  %s7 = scalar_select 0, %s6, %s4
  $region1: #{tpu_custom_call.1} parent=0
    #allocation2 [shape = 'u8[16384]{0}', space=vmem, size = 0x4000, scoped, tag = 'input window, operand 0, single buffered']
    #allocation3 [shape = 's32[1]{0}', space=sflag, size = 0x4, scoped, tag = 'scoped memory for tpu_custom_call.1']
    #allocation4 [shape = 's32[1]{0}', space=sflag, size = 0x4, scoped, tag = 'scoped memory for tpu_custom_call.1']
    #allocation5 [shape = 'u8[262144]{0}', space=vmem, size = 0x40000, scoped, tag = 'input window, operand 1, single buffered']
    #allocation6 [shape = 's32[1]{0}', space=sflag, size = 0x4, scoped, tag = 'scoped memory for tpu_custom_call.1']
    #allocation7 [shape = 'u8[4096]{0}', space=vmem, size = 0x1000, scoped, tag = 'output window, operand 0, single buffered']
    %8 = vsyncpa [#allocation3], 0
    %9 = vsyncpa [#allocation6], 0
    %10 = vsyncpa [#allocation4], 0
    // Predicated region
    $region2: #{tpu_custom_call.1} parent=1 // pred_check
      _
    $region3: #{tpu_custom_call.1} parent=1 // pred_check_branch
      %12 = sbr.rel (0) target = $region5
    $region4: #{tpu_custom_call.1} parent=1 // pred_region
      %s14 = ssub.s32 512, 128
      %15 = vsyncadd [#allocation3], %s14
      %s16 = sshll.u32 [#allocation2], 4
      %s17 = int_to_ptr.vmem [resolvable:$true] %s16
      %22 = dma.hbm_to_vmem [thread:$0]  %s0, 128, %s17, [#allocation3], 128, 128, 8
    $region5: #{tpu_custom_call.1} parent=1 // pred_fallthru
      _
    // Predicated region
    $region6: #{tpu_custom_call.1} parent=1 // pred_check
      _
    $region7: #{tpu_custom_call.1} parent=1 // pred_check_branch
      %24 = sbr.rel (0) target = $region9
    $region8: #{tpu_custom_call.1} parent=1 // pred_region
      %s26 = ssub.s32 8192, 8192
      %27 = vsyncadd [#allocation6], %s26
      %s28 = sshll.u32 [#allocation5], 4
      %s29 = int_to_ptr.vmem [resolvable:$true] %s28
      %34 = dma.hbm_to_vmem [thread:$0]  %s1, 8192, %s29, [#allocation6], 128, 128, 8
    $region9: #{tpu_custom_call.1} parent=1 // pred_fallthru
      _
    // Predicated region
    $region10: #{tpu_custom_call.1} parent=1 // pred_check
      _
    $region11: #{tpu_custom_call.1} parent=1 // pred_check_branch
      %36 = sbr.rel (0) target = $region13
    $region12: #{tpu_custom_call.1} parent=1 // pred_region
      _
    $region13: #{tpu_custom_call.1} parent=1 // pred_fallthru
      _
    // Predicated region
    $region14: #{tpu_custom_call.1} parent=1 // pred_check
      _
    $region15: #{tpu_custom_call.1} parent=1 // pred_check_branch
      %38 = sbr.rel (0) target = $region17
    $region16: #{tpu_custom_call.1} parent=1 // pred_region
      %39 = dma.done [#allocation3], 512
    $region17: #{tpu_custom_call.1} parent=1 // pred_fallthru
      _
    // Predicated region
    $region18: #{tpu_custom_call.1} parent=1 // pred_check
      _
    $region19: #{tpu_custom_call.1} parent=1 // pred_check_branch
      %41 = sbr.rel (0) target = $region21
    $region20: #{tpu_custom_call.1} parent=1 // pred_region
      %42 = dma.done [#allocation6], 8192
    $region21: #{tpu_custom_call.1} parent=1 // pred_fallthru
      _
    %v43 = vld [vmem:[#allocation2] sm:$0xff]
    %v44 = vld [vmem:[#allocation2 + $0x8] sm:$0xff]
    %v45 = vld [vmem:[#allocation2 + $0x10] sm:$0xff]
    %v46 = vld [vmem:[#allocation2 + $0x18] sm:$0xff]
    %v47 = vld [vmem:[#allocation5] sm:$0xff]
    %v48 = vld [vmem:[#allocation5 + $0x8] sm:$0xff]
    %v49 = vld [vmem:[#allocation5 + $0x10] sm:$0xff]
    %v50 = vld [vmem:[#allocation5 + $0x18] sm:$0xff]
    %v51 = vld [vmem:[#allocation5 + $0x20] sm:$0xff]
    %v52 = vld [vmem:[#allocation5 + $0x28] sm:$0xff]
    %v53 = vld [vmem:[#allocation5 + $0x30] sm:$0xff]
    %v54 = vld [vmem:[#allocation5 + $0x38] sm:$0xff]
    %v55 = vld [vmem:[#allocation5 + $0x40] sm:$0xff]
    %v56 = vld [vmem:[#allocation5 + $0x48] sm:$0xff]
    %v57 = vld [vmem:[#allocation5 + $0x50] sm:$0xff]
    %v58 = vld [vmem:[#allocation5 + $0x58] sm:$0xff]
    %v59 = vld [vmem:[#allocation5 + $0x60] sm:$0xff]
    %v60 = vld [vmem:[#allocation5 + $0x68] sm:$0xff]
    %v61 = vld [vmem:[#allocation5 + $0x70] sm:$0xff]
    %v62 = vld [vmem:[#allocation5 + $0x78] sm:$0xff]
    %v63 = vld [vmem:[#allocation5 + $0x80] sm:$0xff]
    %v64 = vld [vmem:[#allocation5 + $0x88] sm:$0xff]
    %v65 = vld [vmem:[#allocation5 + $0x90] sm:$0xff]
    %v66 = vld [vmem:[#allocation5 + $0x98] sm:$0xff]
    %v67 = vld [vmem:[#allocation5 + $0xa0] sm:$0xff]
    %v68 = vld [vmem:[#allocation5 + $0xa8] sm:$0xff]
    %v69 = vld [vmem:[#allocation5 + $0xb0] sm:$0xff]
    %v70 = vld [vmem:[#allocation5 + $0xb8] sm:$0xff]
    %v71 = vld [vmem:[#allocation5 + $0xc0] sm:$0xff]
    %v72 = vld [vmem:[#allocation5 + $0xc8] sm:$0xff]
    %v73 = vld [vmem:[#allocation5 + $0xd0] sm:$0xff]
    %v74 = vld [vmem:[#allocation5 + $0xd8] sm:$0xff]
    %v75 = vld [vmem:[#allocation5 + $0xe0] sm:$0xff]
    %v76 = vld [vmem:[#allocation5 + $0xe8] sm:$0xff]
    %v77 = vld [vmem:[#allocation5 + $0xf0] sm:$0xff]
    %v78 = vld [vmem:[#allocation5 + $0xf8] sm:$0xff]
    %v79 = vld [vmem:[#allocation5 + $0x100] sm:$0xff]
    %v80 = vld [vmem:[#allocation5 + $0x108] sm:$0xff]
    %v81 = vld [vmem:[#allocation5 + $0x110] sm:$0xff]
    %v82 = vld [vmem:[#allocation5 + $0x118] sm:$0xff]
    %v83 = vld [vmem:[#allocation5 + $0x120] sm:$0xff]
    %v84 = vld [vmem:[#allocation5 + $0x128] sm:$0xff]
    %v85 = vld [vmem:[#allocation5 + $0x130] sm:$0xff]
    %v86 = vld [vmem:[#allocation5 + $0x138] sm:$0xff]
    %v87 = vld [vmem:[#allocation5 + $0x140] sm:$0xff]
    %v88 = vld [vmem:[#allocation5 + $0x148] sm:$0xff]
    %v89 = vld [vmem:[#allocation5 + $0x150] sm:$0xff]
    %v90 = vld [vmem:[#allocation5 + $0x158] sm:$0xff]
    %v91 = vld [vmem:[#allocation5 + $0x160] sm:$0xff]
    %v92 = vld [vmem:[#allocation5 + $0x168] sm:$0xff]
    %v93 = vld [vmem:[#allocation5 + $0x170] sm:$0xff]
    %v94 = vld [vmem:[#allocation5 + $0x178] sm:$0xff]
    %v95 = vld [vmem:[#allocation5 + $0x180] sm:$0xff]
    %v96 = vld [vmem:[#allocation5 + $0x188] sm:$0xff]
    %v97 = vld [vmem:[#allocation5 + $0x190] sm:$0xff]
    %v98 = vld [vmem:[#allocation5 + $0x198] sm:$0xff]
    %v99 = vld [vmem:[#allocation5 + $0x1a0] sm:$0xff]
    %v100 = vld [vmem:[#allocation5 + $0x1a8] sm:$0xff]
    %v101 = vld [vmem:[#allocation5 + $0x1b0] sm:$0xff]
    %v102 = vld [vmem:[#allocation5 + $0x1b8] sm:$0xff]
    %v103 = vld [vmem:[#allocation5 + $0x1c0] sm:$0xff]
    %v104 = vld [vmem:[#allocation5 + $0x1c8] sm:$0xff]
    %v105 = vld [vmem:[#allocation5 + $0x1d0] sm:$0xff]
    %v106 = vld [vmem:[#allocation5 + $0x1d8] sm:$0xff]
    %v107 = vld [vmem:[#allocation5 + $0x1e0] sm:$0xff]
    %v108 = vld [vmem:[#allocation5 + $0x1e8] sm:$0xff]
    %v109 = vld [vmem:[#allocation5 + $0x1f0] sm:$0xff]
    %v110 = vld [vmem:[#allocation5 + $0x1f8] sm:$0xff]
    %v111 = vld [vmem:[%s2] sm:$0x1]
    %v113 = vlaneseq
    %v114 = vshrl.u32 %v113, 7
    %v115 = vsub.s32 0, %v114
    %v116 = vrot.slane %v111, %v115
    %v122 = vcombine.low %v43, %v44
    %v123 = vcombine.high %v43, %v44
    %v124 = vcombine.low %v45, %v46
    %v125 = vcombine.high %v45, %v46
    %v127 = vunpack.c.l.s4 1983009808
    %v128 = vunpack.c.0.s8 %v127
    %v129 = vlaneseq
    %v130 = vshrl.u32 %v129, 7
    %v131 = vsub.s32 %v128, %v130
    %v132 = vrot.slane %v122, %v131
    %v134 = vunpack.c.l.s4 1983009808
    %v135 = vunpack.c.0.s8 %v134
    %v136 = vlaneseq
    %v137 = vshrl.u32 %v136, 7
    %v138 = vsub.s32 %v135, %v137
    %v139 = vrot.slane %v123, %v138
    %v141 = vunpack.c.l.s4 1983009808
    %v142 = vunpack.c.0.s8 %v141
    %v143 = vlaneseq
    %v144 = vshrl.u32 %v143, 7
    %v145 = vsub.s32 %v142, %v144
    %v146 = vrot.slane %v124, %v145
    %v148 = vunpack.c.l.s4 1983009808
    %v149 = vunpack.c.0.s8 %v148
    %v150 = vlaneseq
    %v151 = vshrl.u32 %v150, 7
    %v152 = vsub.s32 %v149, %v151
    %v153 = vrot.slane %v125, %v152
    %v154 = vcombine.low %v132, %v146
    %v155 = vcombine.high %v132, %v146
    %v156 = vcombine.low %v139, %v153
    %v157 = vcombine.high %v139, %v153
    %162 = vmatprep.subr.mxu0 0.0
    %163 = vmatpush1.msra.mxu0 %v47
    %164 = vmatprep.subr.mxu0 0.0
    %165 = vmatpush1.msra.mxu0 %v48
    %166 = vmatprep.subr.mxu0 0.0
    %167 = vmatpush1.msra.mxu0 %v49
    %168 = vmatprep.subr.mxu0 0.0
    %169 = vmatpush1.msra.mxu0 %v50
    %170 = vmatprep.subr.mxu0 0.0
    %171 = vmatpush1.msra.mxu0 %v51
    %172 = vmatprep.subr.mxu0 0.0
    %173 = vmatpush1.msra.mxu0 %v52
    %174 = vmatprep.subr.mxu0 0.0
    %175 = vmatpush1.msra.mxu0 %v53
    %176 = vmatprep.subr.mxu0 0.0
    %177 = vmatpush1.msra.mxu0 %v54
    %178 = vmatprep.subr.mxu0 0.0
    %179 = vmatpush1.msra.mxu0 %v55
    %180 = vmatprep.subr.mxu0 0.0
    %181 = vmatpush1.msra.mxu0 %v56
    %182 = vmatprep.subr.mxu0 0.0
    %183 = vmatpush1.msra.mxu0 %v57
    %184 = vmatprep.subr.mxu0 0.0
    %185 = vmatpush1.msra.mxu0 %v58
    %186 = vmatprep.subr.mxu0 0.0
    %187 = vmatpush1.msra.mxu0 %v59
    %188 = vmatprep.subr.mxu0 0.0
    %189 = vmatpush1.msra.mxu0 %v60
    %190 = vmatprep.subr.mxu0 0.0
    %191 = vmatpush1.msra.mxu0 %v61
    %192 = vmatprep.subr.mxu0 0.0
    %193 = vmatpush1.msra.mxu0 %v62
    %194 = vmatprep.subr.mxu0 0.0
    %195 = vmatpush1.msra.mxu0 %v63
    %196 = vmatprep.subr.mxu0 0.0
    %197 = vmatpush1.msra.mxu0 %v64
    %198 = vmatprep.subr.mxu0 0.0
    %199 = vmatpush1.msra.mxu0 %v65
    %200 = vmatprep.subr.mxu0 0.0
    %201 = vmatpush1.msra.mxu0 %v66
    %202 = vmatprep.subr.mxu0 0.0
    %203 = vmatpush1.msra.mxu0 %v67
    %204 = vmatprep.subr.mxu0 0.0
    %205 = vmatpush1.msra.mxu0 %v68
    %206 = vmatprep.subr.mxu0 0.0
    %207 = vmatpush1.msra.mxu0 %v69
    %208 = vmatprep.subr.mxu0 0.0
    %209 = vmatpush1.msra.mxu0 %v70
    %210 = vmatprep.subr.mxu0 0.0
    %211 = vmatpush1.msra.mxu0 %v71
    %212 = vmatprep.subr.mxu0 0.0
    %213 = vmatpush1.msra.mxu0 %v72
    %214 = vmatprep.subr.mxu0 0.0
    %215 = vmatpush1.msra.mxu0 %v73
    %216 = vmatprep.subr.mxu0 0.0
    %217 = vmatpush1.msra.mxu0 %v74
    %218 = vmatprep.subr.mxu0 0.0
    %219 = vmatpush1.msra.mxu0 %v75
    %220 = vmatprep.subr.mxu0 0.0
    %221 = vmatpush1.msra.mxu0 %v76
    %222 = vmatprep.subr.mxu0 0.0
    %223 = vmatpush1.msra.mxu0 %v77
    %224 = vmatprep.subr.mxu0 0.0
    %225 = vmatpush1.msra.mxu0 %v78
    %226 = vmatprep.mubr.f32.mxu0 %v155
    %227 = vmatmul.mubr.f32.gmra.mrb[0].mxu0 %v154
    %v228 = vpop.f32.mrb[0].mxu0
    %v229 = vadd.f32 %v116, %v228
    %v230 = vpop.f32.mrb[0].mxu0
    %231 = vdwg.mxu0
    %232 = vmatprep.subr.mxu0 0.0
    %233 = vmatpush1.msra.mxu0 %v79
    %234 = vmatprep.subr.mxu0 0.0
    %235 = vmatpush1.msra.mxu0 %v80
    %236 = vmatprep.subr.mxu0 0.0
    %237 = vmatpush1.msra.mxu0 %v81
    %238 = vmatprep.subr.mxu0 0.0
    %239 = vmatpush1.msra.mxu0 %v82
    %240 = vmatprep.subr.mxu0 0.0
    %241 = vmatpush1.msra.mxu0 %v83
    %242 = vmatprep.subr.mxu0 0.0
    %243 = vmatpush1.msra.mxu0 %v84
    %244 = vmatprep.subr.mxu0 0.0
    %245 = vmatpush1.msra.mxu0 %v85
    %246 = vmatprep.subr.mxu0 0.0
    %247 = vmatpush1.msra.mxu0 %v86
    %248 = vmatprep.subr.mxu0 0.0
    %249 = vmatpush1.msra.mxu0 %v87
    %250 = vmatprep.subr.mxu0 0.0
    %251 = vmatpush1.msra.mxu0 %v88
    %252 = vmatprep.subr.mxu0 0.0
    %253 = vmatpush1.msra.mxu0 %v89
    %254 = vmatprep.subr.mxu0 0.0
    %255 = vmatpush1.msra.mxu0 %v90
    %256 = vmatprep.subr.mxu0 0.0
    %257 = vmatpush1.msra.mxu0 %v91
    %258 = vmatprep.subr.mxu0 0.0
    %259 = vmatpush1.msra.mxu0 %v92
    %260 = vmatprep.subr.mxu0 0.0
    %261 = vmatpush1.msra.mxu0 %v93
    %262 = vmatprep.subr.mxu0 0.0
    %263 = vmatpush1.msra.mxu0 %v94
    %264 = vmatprep.subr.mxu0 0.0
    %265 = vmatpush1.msra.mxu0 %v95
    %266 = vmatprep.subr.mxu0 0.0
    %267 = vmatpush1.msra.mxu0 %v96
    %268 = vmatprep.subr.mxu0 0.0
    %269 = vmatpush1.msra.mxu0 %v97
    %270 = vmatprep.subr.mxu0 0.0
    %271 = vmatpush1.msra.mxu0 %v98
    %272 = vmatprep.subr.mxu0 0.0
    %273 = vmatpush1.msra.mxu0 %v99
    %274 = vmatprep.subr.mxu0 0.0
    %275 = vmatpush1.msra.mxu0 %v100
    %276 = vmatprep.subr.mxu0 0.0
    %277 = vmatpush1.msra.mxu0 %v101
    %278 = vmatprep.subr.mxu0 0.0
    %279 = vmatpush1.msra.mxu0 %v102
    %280 = vmatprep.subr.mxu0 0.0
    %281 = vmatpush1.msra.mxu0 %v103
    %282 = vmatprep.subr.mxu0 0.0
    %283 = vmatpush1.msra.mxu0 %v104
    %284 = vmatprep.subr.mxu0 0.0
    %285 = vmatpush1.msra.mxu0 %v105
    %286 = vmatprep.subr.mxu0 0.0
    %287 = vmatpush1.msra.mxu0 %v106
    %288 = vmatprep.subr.mxu0 0.0
    %289 = vmatpush1.msra.mxu0 %v107
    %290 = vmatprep.subr.mxu0 0.0
    %291 = vmatpush1.msra.mxu0 %v108
    %292 = vmatprep.subr.mxu0 0.0
    %293 = vmatpush1.msra.mxu0 %v109
    %294 = vmatprep.subr.mxu0 0.0
    %295 = vmatpush1.msra.mxu0 %v110
    %296 = vmatprep.mubr.f32.mxu0 %v157
    %297 = vmatmul.mubr.f32.gmra.mrb[0].mxu0 %v156
    %v298 = vpop.f32.mrb[0].mxu0
    %v299 = vadd.f32 %v229, %v298
    %v300 = vpop.f32.mrb[0].mxu0
    %301 = vdwg.mxu0
    %302 = vst [vmem:[#allocation7] sm:$0xff] %v299
    // Predicated region
    $region22: #{tpu_custom_call.1} parent=1 // pred_check
      _
    $region23: #{tpu_custom_call.1} parent=1 // pred_check_branch
      %304 = sbr.rel (0) target = $region25
    $region24: #{tpu_custom_call.1} parent=1 // pred_region
      %s306 = ssub.s32 128, 32
      %307 = vsyncadd [#allocation4], %s306
      %s308 = sshll.u32 [#allocation7], 4
      %s309 = int_to_ptr.vmem [resolvable:$true] %s308
      %314 = dma.vmem_to_hbm [thread:$0]  %s309, 32, %s3, [#allocation4], 32, 32, 2
    $region25: #{tpu_custom_call.1} parent=1 // pred_fallthru
      _
    // Predicated region
    $region26: #{tpu_custom_call.1} parent=1 // pred_check
      _
    $region27: #{tpu_custom_call.1} parent=1 // pred_check_branch
      %316 = sbr.rel (0) target = $region29
    $region28: #{tpu_custom_call.1} parent=1 // pred_region
      %317 = dma.done [#allocation4], 128
    $region29: #{tpu_custom_call.1} parent=1 // pred_fallthru
      _
    %318 = vsyncpa [#allocation3], 1
    %319 = vsyncpa [#allocation6], 1
    %320 = vsyncpa [#allocation4], 1

</llo_original>
